<compile_context>
chip_gen: v7x
topology: tpu7x:2x2x1
jax: 0.10.0
libtpu: 0.0.40
codegen_flags: <defaults>
</compile_context>

<pallas_src>
import functools

import jax
import jax.numpy as jnp
from jax.experimental import pallas as pl
from jax.experimental.pallas import tpu as pltpu


def _round_up(a, m):
    return ((a + m - 1) // m) * m


def _vmem_limit_bytes():
    # Generation-aware scoped-VMEM budget (v7x: 64 MiB total, v5e/v6e: 128 MiB).
    try:
        cap = pltpu.get_tpu_info().vmem_capacity_bytes
    except Exception:
        cap = 64 * 1024 * 1024
    return int(max(32 * 1024 * 1024, min(cap * 3 // 4, 100 * 1024 * 1024)))


@functools.partial(jax.jit, static_argnames=("stride", "padding", "dilation"))
def basic_conv2d(x_nchw, weight_oihw, gamma, beta, running_mean, running_var,
                 *, stride=1, padding=0, dilation=1, eps=1e-5):
    N, C, H, W = x_nchw.shape
    OC, _, KH, KW = weight_oihw.shape
    s, d = stride, dilation

    OH = (H + 2 * padding - d * (KH - 1) - 1) // s + 1
    OW = (W + 2 * padding - d * (KW - 1) - 1) // s + 1

    # --------------------------- static geometry ----------------------------
    Cp = _round_up(C, 8)                 # per-tap channel pad -> aligned stores
    Kp = KH * KW * Cp                    # fused contraction depth (padded)
    OCP = _round_up(OC, 8)               # out-channels padded to sublane multiple
    dr_max = ((KH - 1) * d) // s         # max per-tap row offset (decimated grid)
    dc_max = ((KW - 1) * d) // s         # max per-tap col offset (decimated grid)
    PITCH = OW + dc_max                  # flat row pitch: OW valid + garbage cols
    P = s * s                            # polyphase planes

    # rows per chunk: cap the per-chunk VMEM working set (patch + f32 dot tile).
    bytes_per_pix = Kp * 2 + OCP * 4 + OC * 2
    tmc_cap = max(PITCH, (6 << 20) // bytes_per_pix)
    th = max(1, min(OH, tmc_cap // PITCH))
    n_chunks = -(-OH // th)
    OHp = n_chunks * th                  # rows computed (garbage tail sliced off)
    TMC = th * PITCH                     # output pixels per chunk

    HD = OHp + dr_max                    # decimated rows kept per phase
    Lp = _round_up(HD * PITCH + dc_max, 128)   # flat length per phase, lane-dense

    # ---------------------- host-side layout prep (1x) ----------------------
    Hfull, Wfull = HD * s, PITCH * s
    xp = jnp.pad(x_nchw, ((0, 0), (0, 0),
                          (padding, max(0, Hfull - padding - H)),
                          (padding, max(0, Wfull - padding - W))))
    xp = xp[:, :, :Hfull, :Wfull]
    xr = xp.reshape(N, C, HD, s, PITCH, s)
    xs = jnp.transpose(xr, (0, 3, 5, 1, 2, 4)).reshape(N, P, C, HD * PITCH)
    xs = jnp.pad(xs, ((0, 0), (0, 0), (0, 0), (0, Lp - HD * PITCH)))
    xs = xs.astype(jnp.bfloat16)

    # weight (OC,C,KH,KW) -> (OCP, KH*KW*Cp), k ordered (i, j, c); BN scale is
    # kept in the f32 epilogue instead of folded into the bf16 weight.
    wt = jnp.transpose(weight_oihw, (0, 2, 3, 1)).reshape(OC, KH * KW, C)
    wt = jnp.pad(wt, ((0, OCP - OC), (0, 0), (0, Cp - C)))
    wt = wt.reshape(OCP, Kp).astype(jnp.bfloat16)
    inv_std = gamma / jnp.sqrt(running_var + eps)
    scale = jnp.pad(inv_std, (0, OCP - OC)).reshape(OCP, 1).astype(jnp.float32)
    shift = jnp.pad(beta - running_mean * inv_std,
                    (0, OCP - OC)).reshape(OCP, 1).astype(jnp.float32)

    # ------------------------------- kernel ---------------------------------
    def kernel(x_ref, w_ref, scale_ref, shift_ref, o_ref, patch_ref):
        @pl.when(pl.program_id(0) == 0)
        def _init():
            # zero once so the per-tap channel-pad rows contribute exactly 0
            patch_ref[...] = jnp.zeros_like(patch_ref)

        w = w_ref[...]                                   # (OCP, Kp) bf16, stationary
        for cc in range(n_chunks):                       # static row-chunk loop
            base = cc * th * PITCH
            # implicit im2col: KH*KW static dense copies into the (Kp, TMC) scratch
            for i in range(KH):
                for j in range(KW):
                    ph = (i * d % s) * s + (j * d % s)   # polyphase plane (static)
                    off = ((i * d) // s) * PITCH + (j * d) // s
                    r0 = (i * KW + j) * Cp
                    patch_ref[r0:r0 + C, :] = (
                        x_ref[0, ph, :, base + off:base + off + TMC])
            # one deep-K MXU dot; weight as LHS -> result already (OCP, TMC)
            y = jnp.dot(w, patch_ref[...], preferred_element_type=jnp.float32)
            y = y * scale_ref[...] + shift_ref[...]      # fused BN epilogue (f32)
            if OCP != OC:
                y = y[:OC, :]
            o_ref[0, :, cc * TMC:(cc + 1) * TMC] = y.astype(o_ref.dtype)

    out_flat = pl.pallas_call(
        kernel,
        out_shape=jax.ShapeDtypeStruct((N, OC, OHp * PITCH), jnp.bfloat16),
        grid_spec=pltpu.PrefetchScalarGridSpec(
            num_scalar_prefetch=0,
            grid=(N,),
            in_specs=[
                pl.BlockSpec((1, P, C, Lp), lambda n: (n, 0, 0, 0)),
                pl.BlockSpec((OCP, Kp), lambda n: (0, 0)),
                pl.BlockSpec((OCP, 1), lambda n: (0, 0)),
                pl.BlockSpec((OCP, 1), lambda n: (0, 0)),
            ],
            out_specs=pl.BlockSpec((1, OC, OHp * PITCH), lambda n: (n, 0, 0)),
            scratch_shapes=[pltpu.VMEM((Kp, TMC), jnp.bfloat16)],
        ),
        compiler_params=pltpu.CompilerParams(
            dimension_semantics=("parallel",),
            vmem_limit_bytes=_vmem_limit_bytes(),
        ),
    )(xs, wt, scale, shift)

    # (N, OC, OHp*PITCH) -> NCHW: reshape + slice only (no permute pass).
    out = out_flat.reshape(N, OC, OHp, PITCH)[:, :, :OH, :OW]
    return out.astype(jnp.float32)


# --------------------------------- reference ---------------------------------
def _reference(x, weight, gamma, beta, mean, var, *, stride, padding,
               dilation, eps=1e-5):
    y = jax.lax.conv_general_dilated(
        x.astype(jnp.float32), weight.astype(jnp.float32),
        window_strides=(stride, stride),
        padding=[(padding, padding), (padding, padding)],
        rhs_dilation=(dilation, dilation),
        dimension_numbers=("NCHW", "OIHW", "NCHW"))
    sc = (gamma / jnp.sqrt(var + eps)).reshape(1, -1, 1, 1)
    sh = (beta - mean * gamma / jnp.sqrt(var + eps)).reshape(1, -1, 1, 1)
    return y * sc + sh


if __name__ == "__main__":
    # BasicConv2d(in_planes=4, out_planes=8, kernel_size=3, padding=1)
    N, C, H, W = 2, 4, 16, 16
    OC, KH, KW = 8, 3, 3
    stride, padding, dilation = 1, 1, 1

    key = jax.random.PRNGKey(0)
    kx, kw, kg, kb, km, kv = jax.random.split(key, 6)

    x = jax.random.normal(kx, (N, C, H, W), dtype=jnp.float32)
    weight = jax.random.normal(kw, (OC, C, KH, KW), dtype=jnp.float32) * 0.1
    gamma = 1.0 + 0.1 * jax.random.normal(kg, (OC,), dtype=jnp.float32)
    beta = 0.1 * jax.random.normal(kb, (OC,), dtype=jnp.float32)
    running_mean = 0.1 * jax.random.normal(km, (OC,), dtype=jnp.float32)
    running_var = 1.0 + 0.1 * jax.random.uniform(kv, (OC,), dtype=jnp.float32)

    out = basic_conv2d(x, weight, gamma, beta, running_mean, running_var,
                       stride=stride, padding=padding, dilation=dilation)
    out = jax.block_until_ready(out)

    ref = _reference(x, weight, gamma, beta, running_mean, running_var,
                     stride=stride, padding=padding, dilation=dilation)
    assert out.shape == (N, OC, H, W), out.shape
    # bf16 matmul operands with f32 accumulation -> ~1e-2 relative accuracy
    max_err = float(jnp.max(jnp.abs(out - ref)))
    assert jnp.allclose(out, ref, atol=2e-2, rtol=2e-2), (
        f"mismatch vs reference; max abs err = {max_err}")

    print("KERNEL_OK")
</pallas_src>

<mosaic_0001>
module attributes {stable_mosaic.version = 11 : i64} {
  func.func @kernel(%arg0: i32, %arg1: memref<1x1x4x384xbf16, #tpu.memory_space<vmem>>, %arg2: memref<8x72xbf16, #tpu.memory_space<vmem>>, %arg3: memref<8x1xf32, #tpu.memory_space<vmem>>, %arg4: memref<8x1xf32, #tpu.memory_space<vmem>>, %arg5: memref<1x8x288xbf16, #tpu.memory_space<vmem>>, %arg6: memref<72x288xbf16, #tpu.memory_space<vmem>>) attributes {dimension_semantics = [#tpu.dimension_semantics<parallel>], iteration_bounds = array<i64: 2>, scalar_prefetch = 0 : i64, scratch_operands = 1 : i64, tpu.core_type = #tpu.core_type<tc>, window_params = [{transform_indices = @transform_0, window_bounds = array<i64: 1, 1, 4, 384>}, {pipeline_mode = #tpu.pipeline_mode<synchronous>, transform_indices = @transform_1, window_bounds = array<i64: 8, 72>}, {pipeline_mode = #tpu.pipeline_mode<synchronous>, transform_indices = @transform_2, window_bounds = array<i64: 8, 1>}, {pipeline_mode = #tpu.pipeline_mode<synchronous>, transform_indices = @transform_3, window_bounds = array<i64: 8, 1>}, {transform_indices = @transform_4, window_bounds = array<i64: 1, 8, 288>}]} {
    %c0_i32 = arith.constant 0 : i32
    %0 = arith.cmpi eq, %arg0, %c0_i32 : i32
    %1 = arith.extui %0 : i1 to i32
    %c0_i32_0 = arith.constant 0 : i32
    %2 = arith.cmpi ne, %1, %c0_i32_0 : i32
    scf.if %2 {
      %cst_49 = arith.constant 0.000000e+00 : bf16
      %43 = vector.broadcast %cst_49 : bf16 to vector<72x288xbf16>
      %c0_50 = arith.constant 0 : index
      %c0_51 = arith.constant 0 : index
      %44 = vector.load %arg6[%c0_50, %c0_51] : memref<72x288xbf16, #tpu.memory_space<vmem>>, vector<72x288xbf16>
      tpu.vector_store %arg6[%c0_50, %c0_51], %43 {strides = array<i32>} : memref<72x288xbf16, #tpu.memory_space<vmem>>, vector<72x288xbf16>,
    } else {
    }
    %c0 = arith.constant 0 : index
    %c0_1 = arith.constant 0 : index
    %3 = vector.load %arg2[%c0, %c0_1] : memref<8x72xbf16, #tpu.memory_space<vmem>>, vector<8x72xbf16>
    %c0_2 = arith.constant 0 : index
    %c0_3 = arith.constant 0 : index
    %c0_4 = arith.constant 0 : index
    %c0_5 = arith.constant 0 : index
    %4 = vector.load %arg1[%c0_2, %c0_3, %c0_4, %c0_5] : memref<1x1x4x384xbf16, #tpu.memory_space<vmem>>, vector<1x1x4x288xbf16>
    %5 = vector.shape_cast %4 : vector<1x1x4x288xbf16> to vector<4x288xbf16>
    %c0_6 = arith.constant 0 : index
    %c0_7 = arith.constant 0 : index
    %6 = vector.load %arg6[%c0_6, %c0_7] : memref<72x288xbf16, #tpu.memory_space<vmem>>, vector<4x288xbf16>
    tpu.vector_store %arg6[%c0_6, %c0_7], %5 {strides = array<i32>} : memref<72x288xbf16, #tpu.memory_space<vmem>>, vector<4x288xbf16>,
    %c0_8 = arith.constant 0 : index
    %c0_9 = arith.constant 0 : index
    %c0_10 = arith.constant 0 : index
    %c1 = arith.constant 1 : index
    %7 = vector.load %arg1[%c0_8, %c0_9, %c0_10, %c1] : memref<1x1x4x384xbf16, #tpu.memory_space<vmem>>, vector<1x1x4x288xbf16>
    %8 = vector.shape_cast %7 : vector<1x1x4x288xbf16> to vector<4x288xbf16>
    %c8 = arith.constant 8 : index
    %c0_11 = arith.constant 0 : index
    %9 = vector.load %arg6[%c8, %c0_11] : memref<72x288xbf16, #tpu.memory_space<vmem>>, vector<4x288xbf16>
    tpu.vector_store %arg6[%c8, %c0_11], %8 {strides = array<i32>} : memref<72x288xbf16, #tpu.memory_space<vmem>>, vector<4x288xbf16>,
    %c0_12 = arith.constant 0 : index
    %c0_13 = arith.constant 0 : index
    %c0_14 = arith.constant 0 : index
    %c2 = arith.constant 2 : index
    %10 = vector.load %arg1[%c0_12, %c0_13, %c0_14, %c2] : memref<1x1x4x384xbf16, #tpu.memory_space<vmem>>, vector<1x1x4x288xbf16>
    %11 = vector.shape_cast %10 : vector<1x1x4x288xbf16> to vector<4x288xbf16>
    %c16 = arith.constant 16 : index
    %c0_15 = arith.constant 0 : index
    %12 = vector.load %arg6[%c16, %c0_15] : memref<72x288xbf16, #tpu.memory_space<vmem>>, vector<4x288xbf16>
    tpu.vector_store %arg6[%c16, %c0_15], %11 {strides = array<i32>} : memref<72x288xbf16, #tpu.memory_space<vmem>>, vector<4x288xbf16>,
    %c0_16 = arith.constant 0 : index
    %c0_17 = arith.constant 0 : index
    %c0_18 = arith.constant 0 : index
    %c18 = arith.constant 18 : index
    %13 = vector.load %arg1[%c0_16, %c0_17, %c0_18, %c18] : memref<1x1x4x384xbf16, #tpu.memory_space<vmem>>, vector<1x1x4x288xbf16>
    %14 = vector.shape_cast %13 : vector<1x1x4x288xbf16> to vector<4x288xbf16>
    %c24 = arith.constant 24 : index
    %c0_19 = arith.constant 0 : index
    %15 = vector.load %arg6[%c24, %c0_19] : memref<72x288xbf16, #tpu.memory_space<vmem>>, vector<4x288xbf16>
    tpu.vector_store %arg6[%c24, %c0_19], %14 {strides = array<i32>} : memref<72x288xbf16, #tpu.memory_space<vmem>>, vector<4x288xbf16>,
    %c0_20 = arith.constant 0 : index
    %c0_21 = arith.constant 0 : index
    %c0_22 = arith.constant 0 : index
    %c19 = arith.constant 19 : index
    %16 = vector.load %arg1[%c0_20, %c0_21, %c0_22, %c19] : memref<1x1x4x384xbf16, #tpu.memory_space<vmem>>, vector<1x1x4x288xbf16>
    %17 = vector.shape_cast %16 : vector<1x1x4x288xbf16> to vector<4x288xbf16>
    %c32 = arith.constant 32 : index
    %c0_23 = arith.constant 0 : index
    %18 = vector.load %arg6[%c32, %c0_23] : memref<72x288xbf16, #tpu.memory_space<vmem>>, vector<4x288xbf16>
    tpu.vector_store %arg6[%c32, %c0_23], %17 {strides = array<i32>} : memref<72x288xbf16, #tpu.memory_space<vmem>>, vector<4x288xbf16>,
    %c0_24 = arith.constant 0 : index
    %c0_25 = arith.constant 0 : index
    %c0_26 = arith.constant 0 : index
    %c20 = arith.constant 20 : index
    %19 = vector.load %arg1[%c0_24, %c0_25, %c0_26, %c20] : memref<1x1x4x384xbf16, #tpu.memory_space<vmem>>, vector<1x1x4x288xbf16>
    %20 = vector.shape_cast %19 : vector<1x1x4x288xbf16> to vector<4x288xbf16>
    %c40 = arith.constant 40 : index
    %c0_27 = arith.constant 0 : index
    %21 = vector.load %arg6[%c40, %c0_27] : memref<72x288xbf16, #tpu.memory_space<vmem>>, vector<4x288xbf16>
    tpu.vector_store %arg6[%c40, %c0_27], %20 {strides = array<i32>} : memref<72x288xbf16, #tpu.memory_space<vmem>>, vector<4x288xbf16>,
    %c0_28 = arith.constant 0 : index
    %c0_29 = arith.constant 0 : index
    %c0_30 = arith.constant 0 : index
    %c36 = arith.constant 36 : index
    %22 = vector.load %arg1[%c0_28, %c0_29, %c0_30, %c36] : memref<1x1x4x384xbf16, #tpu.memory_space<vmem>>, vector<1x1x4x288xbf16>
    %23 = vector.shape_cast %22 : vector<1x1x4x288xbf16> to vector<4x288xbf16>
    %c48 = arith.constant 48 : index
    %c0_31 = arith.constant 0 : index
    %24 = vector.load %arg6[%c48, %c0_31] : memref<72x288xbf16, #tpu.memory_space<vmem>>, vector<4x288xbf16>
    tpu.vector_store %arg6[%c48, %c0_31], %23 {strides = array<i32>} : memref<72x288xbf16, #tpu.memory_space<vmem>>, vector<4x288xbf16>,
    %c0_32 = arith.constant 0 : index
    %c0_33 = arith.constant 0 : index
    %c0_34 = arith.constant 0 : index
    %c37 = arith.constant 37 : index
    %25 = vector.load %arg1[%c0_32, %c0_33, %c0_34, %c37] : memref<1x1x4x384xbf16, #tpu.memory_space<vmem>>, vector<1x1x4x288xbf16>
    %26 = vector.shape_cast %25 : vector<1x1x4x288xbf16> to vector<4x288xbf16>
    %c56 = arith.constant 56 : index
    %c0_35 = arith.constant 0 : index
    %27 = vector.load %arg6[%c56, %c0_35] : memref<72x288xbf16, #tpu.memory_space<vmem>>, vector<4x288xbf16>
    tpu.vector_store %arg6[%c56, %c0_35], %26 {strides = array<i32>} : memref<72x288xbf16, #tpu.memory_space<vmem>>, vector<4x288xbf16>,
    %c0_36 = arith.constant 0 : index
    %c0_37 = arith.constant 0 : index
    %c0_38 = arith.constant 0 : index
    %c38 = arith.constant 38 : index
    %28 = vector.load %arg1[%c0_36, %c0_37, %c0_38, %c38] : memref<1x1x4x384xbf16, #tpu.memory_space<vmem>>, vector<1x1x4x288xbf16>
    %29 = vector.shape_cast %28 : vector<1x1x4x288xbf16> to vector<4x288xbf16>
    %c64 = arith.constant 64 : index
    %c0_39 = arith.constant 0 : index
    %30 = vector.load %arg6[%c64, %c0_39] : memref<72x288xbf16, #tpu.memory_space<vmem>>, vector<4x288xbf16>
    tpu.vector_store %arg6[%c64, %c0_39], %29 {strides = array<i32>} : memref<72x288xbf16, #tpu.memory_space<vmem>>, vector<4x288xbf16>,
    %c0_40 = arith.constant 0 : index
    %c0_41 = arith.constant 0 : index
    %31 = vector.load %arg6[%c0_40, %c0_41] : memref<72x288xbf16, #tpu.memory_space<vmem>>, vector<72x288xbf16>
    %cst = arith.constant dense<0.000000e+00> : vector<8x288xf32>
    %32 = tpu.matmul %3, %31, %cst {dimension_numbers = #tpu.dot_dimension_numbers<[1], [0], [0], [1], [0, 0, 1, 1], [], []>} : vector<8x72xbf16>, vector<72x288xbf16>, vector<8x288xf32> -> vector<8x288xf32>
    %c0_42 = arith.constant 0 : index
    %c0_43 = arith.constant 0 : index
    %33 = vector.load %arg3[%c0_42, %c0_43] : memref<8x1xf32, #tpu.memory_space<vmem>>, vector<8x1xf32>
    %34 = vector.broadcast %33 : vector<8x1xf32> to vector<8x288xf32>
    %35 = arith.mulf %32, %34 : vector<8x288xf32>
    %c0_44 = arith.constant 0 : index
    %c0_45 = arith.constant 0 : index
    %36 = vector.load %arg4[%c0_44, %c0_45] : memref<8x1xf32, #tpu.memory_space<vmem>>, vector<8x1xf32>
    %37 = vector.broadcast %36 : vector<8x1xf32> to vector<8x288xf32>
    %38 = arith.addf %35, %37 : vector<8x288xf32>
    %39 = arith.truncf %38 : vector<8x288xf32> to vector<8x288xbf16>
    %c0_46 = arith.constant 0 : index
    %c0_47 = arith.constant 0 : index
    %c0_48 = arith.constant 0 : index
    %40 = vector.load %arg5[%c0_46, %c0_47, %c0_48] : memref<1x8x288xbf16, #tpu.memory_space<vmem>>, vector<1x8x288xbf16>
    %41 = vector.shape_cast %40 : vector<1x8x288xbf16> to vector<8x288xbf16>
    %42 = vector.shape_cast %39 : vector<8x288xbf16> to vector<1x8x288xbf16>
    tpu.vector_store %arg5[%c0_46, %c0_47, %c0_48], %42 {strides = array<i32>} : memref<1x8x288xbf16, #tpu.memory_space<vmem>>, vector<1x8x288xbf16>,
    return
  }
  func.func @transform_0(%arg0: i32) -> (i32, i32, i32, i32) {
    %c0_i32 = arith.constant 0 : i32
    %c0_i32_0 = arith.constant 0 : i32
    %c0_i32_1 = arith.constant 0 : i32
    %c0_i32_2 = arith.constant 0 : i32
    return %arg0, %c0_i32, %c0_i32_0, %c0_i32_1 : i32, i32, i32, i32
  }
  func.func @transform_1(%arg0: i32) -> (i32, i32) {
    %c0_i32 = arith.constant 0 : i32
    %c0_i32_0 = arith.constant 0 : i32
    %c0_i32_1 = arith.constant 0 : i32
    return %c0_i32, %c0_i32_0 : i32, i32
  }
  func.func @transform_2(%arg0: i32) -> (i32, i32) {
    %c0_i32 = arith.constant 0 : i32
    %c0_i32_0 = arith.constant 0 : i32
    %c0_i32_1 = arith.constant 0 : i32
    return %c0_i32, %c0_i32_0 : i32, i32
  }
  func.func @transform_3(%arg0: i32) -> (i32, i32) {
    %c0_i32 = arith.constant 0 : i32
    %c0_i32_0 = arith.constant 0 : i32
    %c0_i32_1 = arith.constant 0 : i32
    return %c0_i32, %c0_i32_0 : i32, i32
  }
  func.func @transform_4(%arg0: i32) -> (i32, i32, i32) {
    %c0_i32 = arith.constant 0 : i32
    %c0_i32_0 = arith.constant 0 : i32
    %c0_i32_1 = arith.constant 0 : i32
    return %arg0, %c0_i32, %c0_i32_0 : i32, i32, i32
  }
}

</mosaic_0001>

<llo_original>
// kernel: basic_conv2d.1
$region0: #{basic_conv2d.1}
  #allocation0 [shape = 'u32[]', space=smem, size = 0x4, offset = 0x4, fixed_abs, tag = 'smem constant byte address 0x4 - core index']
  #allocation1 [shape = 'u32[144,128]{1,0:T(1,128)}', space=vmem, size = 0x12000, scoped, tag = 'internal scratch']
  #allocation2 [shape = 'bf16[72,288]{1,0:T(8,128)(2,1)}', space=vmem, size = 0xd800, scoped, tag = 'scratch operand']
  %s0 = inlined_call_operand.vmem [shape: bf16[2,1,4,384], index: 0, kind: input, shape index: {}]
  %s1 = inlined_call_operand.vmem [shape: bf16[8,72], index: 1, kind: input, shape index: {}]
  %s2 = inlined_call_operand.vmem [shape: f32[8,1], index: 2, kind: input, shape index: {}]
  %s3 = inlined_call_operand.vmem [shape: f32[8,1], index: 3, kind: input, shape index: {}]
  %s4 = inlined_call_operand.vmem [shape: bf16[2,8,288], index: 4, kind: output, shape index: {}]
  %s5 = sld [smem:[#allocation0]]
  $region53: #{basic_conv2d.1} parent=0
    _
  %s7 = ssub.s32 1, %s5
  %s8 = scalar_select 0, %s7, %s5
  loop: start=0, step=1, limit=4
  $region2: #{basic_conv2d.1} parent=0 // loop_pre_header
    _
  $region3: #{basic_conv2d.1} parent=0 // loop_header
    %s10 = sphi 0, %s14
    %p11 = scmp.ge.s32.totalorder %s10, 4
    %s20 = sphi 0, %s22
    %s23 = sphi 0, %s20
    %s24 = sphi 0, %s23
    %s40 = sphi 0, %s24
    %s44 = sphi 0, %s44
    %s46 = sphi 0, %s44
    %s47 = sphi 0, %s46
    %s61 = sphi 0, %s47
    %s65 = sphi 0, %s65
    %s67 = sphi 0, %s65
    %s68 = sphi 0, %s67
    %s82 = sphi 0, %s68
    %s86 = sphi 0, %s86
    %s88 = sphi 0, %s86
    %s89 = sphi 0, %s88
    %s103 = sphi 0, %s89
    %s109 = sphi 0, %s111
    %s112 = sphi 0, %s109
    %s113 = sphi 0, %s112
    %s129 = sphi 0, %s113
  $region4: #{basic_conv2d.1} parent=0 // loop_header_branch
    %13 = sbr.rel (%p11) target = $region8
  $region5: #{basic_conv2d.1} parent=0 // loop_body
    %s15 = ssub.s32 %s10, 1
    %s16 = ssub.s32 %s10, 2
    %s17 = sadd.s32 %s10, 1
    %s18 = ssub.s32 %s10, %s17
    %p19 = scmp.eq.s32.totalorder %s18, 0
    %s21 = sadd.s32 %s20, 1
    %s22 = scalar_select %p19, %s20, %s21
    %p25 = pneg %p19
    %p26 = scmp.eq.s32.totalorder %s10, 1
    %p27 = por %p25, %p26
    %p28 = scmp.ne.s32.totalorder %s20, %s23
    %p29 = scmp.eq.s32.totalorder %s10, 0
    %p30 = por %p28, %p29
    %p31 = scmp.ne.s32.totalorder %s20, %s23
    %p32 = scmp.eq.s32.totalorder %s15, 1
    %p33 = por %p31, %p32
    %p34 = scmp.ne.s32.totalorder %s23, %s24
    %p35 = scmp.eq.s32.totalorder %s15, 0
    %p36 = por %p34, %p35
    %p37 = scmp.ne.s32.totalorder %s23, %s24
    %p38 = scmp.eq.s32.totalorder %s16, 1
    %p39 = por %p37, %p38
    %p41 = scmp.ne.s32.totalorder %s24, %s40
    %p42 = scmp.eq.s32.totalorder %s16, 0
    %p43 = por %p41, %p42
    %s45 = sadd.s32 %s44, 1
    %p48 = scmp.eq.s32.totalorder %s10, 1
    %p49 = scmp.ne.s32.totalorder %s44, %s46
    %p50 = scmp.eq.s32.totalorder %s10, 0
    %p51 = por %p49, %p50
    %p52 = scmp.ne.s32.totalorder %s44, %s46
    %p53 = scmp.eq.s32.totalorder %s15, 1
    %p54 = por %p52, %p53
    %p55 = scmp.ne.s32.totalorder %s46, %s47
    %p56 = scmp.eq.s32.totalorder %s15, 0
    %p57 = por %p55, %p56
    %p58 = scmp.ne.s32.totalorder %s46, %s47
    %p59 = scmp.eq.s32.totalorder %s16, 1
    %p60 = por %p58, %p59
    %p62 = scmp.ne.s32.totalorder %s47, %s61
    %p63 = scmp.eq.s32.totalorder %s16, 0
    %p64 = por %p62, %p63
    %s66 = sadd.s32 %s65, 1
    %p69 = scmp.eq.s32.totalorder %s10, 1
    %p70 = scmp.ne.s32.totalorder %s65, %s67
    %p71 = scmp.eq.s32.totalorder %s10, 0
    %p72 = por %p70, %p71
    %p73 = scmp.ne.s32.totalorder %s65, %s67
    %p74 = scmp.eq.s32.totalorder %s15, 1
    %p75 = por %p73, %p74
    %p76 = scmp.ne.s32.totalorder %s67, %s68
    %p77 = scmp.eq.s32.totalorder %s15, 0
    %p78 = por %p76, %p77
    %p79 = scmp.ne.s32.totalorder %s67, %s68
    %p80 = scmp.eq.s32.totalorder %s16, 1
    %p81 = por %p79, %p80
    %p83 = scmp.ne.s32.totalorder %s68, %s82
    %p84 = scmp.eq.s32.totalorder %s16, 0
    %p85 = por %p83, %p84
    %s87 = sadd.s32 %s86, 1
    %p90 = scmp.eq.s32.totalorder %s10, 1
    %p91 = scmp.ne.s32.totalorder %s86, %s88
    %p92 = scmp.eq.s32.totalorder %s10, 0
    %p93 = por %p91, %p92
    %p94 = scmp.ne.s32.totalorder %s86, %s88
    %p95 = scmp.eq.s32.totalorder %s15, 1
    %p96 = por %p94, %p95
    %p97 = scmp.ne.s32.totalorder %s88, %s89
    %p98 = scmp.eq.s32.totalorder %s15, 0
    %p99 = por %p97, %p98
    %p100 = scmp.ne.s32.totalorder %s88, %s89
    %p101 = scmp.eq.s32.totalorder %s16, 1
    %p102 = por %p100, %p101
    %p104 = scmp.ne.s32.totalorder %s89, %s103
    %p105 = scmp.eq.s32.totalorder %s16, 0
    %p106 = por %p104, %p105
    %s107 = ssub.s32 %s10, %s17
    %p108 = scmp.eq.s32.totalorder %s107, 0
    %s110 = sadd.s32 %s109, 1
    %s111 = scalar_select %p108, %s109, %s110
    %p114 = pneg %p108
    %p115 = scmp.eq.s32.totalorder %s10, 1
    %p116 = por %p114, %p115
    %p117 = scmp.ne.s32.totalorder %s109, %s112
    %p118 = scmp.eq.s32.totalorder %s10, 0
    %p119 = por %p117, %p118
    %p120 = scmp.ne.s32.totalorder %s109, %s112
    %p121 = scmp.eq.s32.totalorder %s15, 1
    %p122 = por %p120, %p121
    %p123 = scmp.ne.s32.totalorder %s112, %s113
    %p124 = scmp.eq.s32.totalorder %s15, 0
    %p125 = por %p123, %p124
    %p126 = scmp.ne.s32.totalorder %s112, %s113
    %p127 = scmp.eq.s32.totalorder %s16, 1
    %p128 = por %p126, %p127
    %p130 = scmp.ne.s32.totalorder %s113, %s129
    %p131 = scmp.eq.s32.totalorder %s16, 0
    %p132 = por %p130, %p131
    %p133 = scmp.le.s32.totalorder 1, %s10
    %p134 = scmp.lt.s32.totalorder %s10, 3
    %p135 = pnand %p133, %p134
    %p136 = pneg %p135
    // Predicated region
    $region9: #{basic_conv2d.1} parent=5 // pred_check
      _
    $region10: #{basic_conv2d.1} parent=5 // pred_check_branch
      %138 = sbr.rel (%p135) target = $region12
    $region11: #{basic_conv2d.1} parent=5 // pred_region
      %s139 = ssub.s32 %s10, 1
      // Predicated region
      $region13: #{basic_conv2d.1} parent=11 // pred_check
        %p140 = pneg %p57
      $region14: #{basic_conv2d.1} parent=11 // pred_check_branch
        %142 = sbr.rel (%p140) target = $region16
      $region15: #{basic_conv2d.1} parent=11 // pred_region
        _
      $region16: #{basic_conv2d.1} parent=11 // pred_fallthru
        _
      // Predicated region
      $region17: #{basic_conv2d.1} parent=11 // pred_check
        %p143 = pneg %p78
      $region18: #{basic_conv2d.1} parent=11 // pred_check_branch
        %145 = sbr.rel (%p143) target = $region20
      $region19: #{basic_conv2d.1} parent=11 // pred_region
        _
      $region20: #{basic_conv2d.1} parent=11 // pred_fallthru
        _
      // Predicated region
      $region21: #{basic_conv2d.1} parent=11 // pred_check
        %p146 = pneg %p99
      $region22: #{basic_conv2d.1} parent=11 // pred_check_branch
        %148 = sbr.rel (%p146) target = $region24
      $region23: #{basic_conv2d.1} parent=11 // pred_region
        _
      $region24: #{basic_conv2d.1} parent=11 // pred_fallthru
        _
    $region12: #{basic_conv2d.1} parent=5 // pred_fallthru
      _
    %p149 = scmp.lt.s32.totalorder %s10, 2
    // Predicated region
    $region25: #{basic_conv2d.1} parent=5 // pred_check
      %p150 = pneg %p149
    $region26: #{basic_conv2d.1} parent=5 // pred_check_branch
      %152 = sbr.rel (%p150) target = $region28
    $region27: #{basic_conv2d.1} parent=5 // pred_region
      // Predicated region
      $region29: #{basic_conv2d.1} parent=27 // pred_check
        %p153 = pneg %p30
      $region30: #{basic_conv2d.1} parent=27 // pred_check_branch
        %155 = sbr.rel (%p153) target = $region32
      $region31: #{basic_conv2d.1} parent=27 // pred_region
        %p156 = scmp.lt.s32.totalorder %s10, 1
        %s157 = scalar_select %p156, %s10, 1
        %s158 = smul.addr %s157, 3
        %s159 = smul.addr %s158, 2
        %s160 = scalar_lea.vmem %s0, %s159
      $region32: #{basic_conv2d.1} parent=27 // pred_fallthru
        _
    $region28: #{basic_conv2d.1} parent=5 // pred_fallthru
      _
    %p161 = scmp.le.s32.totalorder 1, %s10
    %p162 = scmp.lt.s32.totalorder %s10, 3
    %p163 = pnand %p161, %p162
    %p164 = pneg %p163
    // Predicated region
    $region33: #{basic_conv2d.1} parent=5 // pred_check
      _
    $region34: #{basic_conv2d.1} parent=5 // pred_check_branch
      %166 = sbr.rel (%p163) target = $region36
    $region35: #{basic_conv2d.1} parent=5 // pred_region
      %s167 = ssub.s32 %s10, 1
      %p168 = scmp.lt.s32.totalorder %s15, 1
      %s169 = scalar_select %p168, %s15, 1
      %s170 = smul.addr %s169, 3
      %s171 = smul.addr %s170, 2
      %s172 = scalar_lea.vmem %s0, %s171
      %p173 = pneg %p36
      %p174 = pneg %p33
      %p175 = pneg %p57
      %p176 = pneg %p54
      %p177 = pneg %p78
      %p178 = pneg %p75
      %p179 = pneg %p99
      %p180 = pneg %p96
      %p181 = pneg %p125
      %p182 = pneg %p122
      %p183 = scmp.lt.s32.totalorder %s15, 1
      %s184 = scalar_select %p183, %s15, 1
      %s185 = smul.addr %s184, 3
      %s186 = smul.addr %s185, 4
      %s187 = scalar_lea.vmem %s4, %s186
      %p188 = scmp.lt.s32.totalorder %s15, 1
      %s189 = scalar_select %p188, %s15, 1
      %s190 = smul.addr %s189, 3
      %s191 = smul.addr %s190, 2
      %s192 = scalar_lea.vmem %s0, %s191
      %p193 = scmp.lt.s32.totalorder %s15, 1
      %s194 = scalar_select %p193, %s15, 1
      %s195 = smul.addr %s194, 3
      %s196 = smul.addr %s195, 4
      %s197 = scalar_lea.vmem %s4, %s196
      %p199 = scmp.eq.s32.totalorder %s15, 0
      // Predicated region
      $region37: #{basic_conv2d.1} parent=35 // pred_check
        %p200 = pneg %p199
      $region38: #{basic_conv2d.1} parent=35 // pred_check_branch
        %202 = sbr.rel (%p200) target = $region40
      $region39: #{basic_conv2d.1} parent=35 // pred_region
        %203 = vst [vmem:[#allocation2] sm:$0xff] 0
        %vm204 = vcmask 257024
        %205 = vst.msk [vmem:[#allocation2 + $0x8] sm:$0xf] %vm204, 0
        %206 = vst [vmem:[#allocation2 + $0xc] sm:$0xff] 0
        %207 = vst.msk [vmem:[#allocation2 + $0x14] sm:$0xf] %vm204, 0
        %208 = vst [vmem:[#allocation2 + $0x18] sm:$0xff] 0
        %209 = vst.msk [vmem:[#allocation2 + $0x20] sm:$0xf] %vm204, 0
        %210 = vst [vmem:[#allocation2 + $0x24] sm:$0xff] 0
        %211 = vst.msk [vmem:[#allocation2 + $0x2c] sm:$0xf] %vm204, 0
        %212 = vst [vmem:[#allocation2 + $0x30] sm:$0xff] 0
        %213 = vst.msk [vmem:[#allocation2 + $0x38] sm:$0xf] %vm204, 0
        %214 = vst [vmem:[#allocation2 + $0x3c] sm:$0xff] 0
        %215 = vst.msk [vmem:[#allocation2 + $0x44] sm:$0xf] %vm204, 0
        %216 = vst [vmem:[#allocation2 + $0x48] sm:$0xff] 0
        %217 = vst.msk [vmem:[#allocation2 + $0x50] sm:$0xf] %vm204, 0
        %218 = vst [vmem:[#allocation2 + $0x54] sm:$0xff] 0
        %219 = vst.msk [vmem:[#allocation2 + $0x5c] sm:$0xf] %vm204, 0
        %220 = vst [vmem:[#allocation2 + $0x60] sm:$0xff] 0
        %221 = vst.msk [vmem:[#allocation2 + $0x68] sm:$0xf] %vm204, 0
      $region40: #{basic_conv2d.1} parent=35 // pred_fallthru
        _
      %v222 = vld [vmem:[%s1] sm:$0xf]
      %v223 = vld [vmem:[%s192] sm:$0x3f]
      %v225 = vcombine.high %v223, %v223
      %v227 = vunpack.c.l.s4 1983009808
      %v228 = vunpack.c.0.s8 %v227
      %v229 = vlaneseq
      %v230 = vshrl.u32 %v229, 7
      %v231 = vsub.s32 %v228, %v230
      %v232 = vrot.slane %v223, %v231
      %v234 = vunpack.c.l.s4 1983009808
      %v235 = vunpack.c.0.s8 %v234
      %v236 = vlaneseq
      %v237 = vshrl.u32 %v236, 7
      %v238 = vsub.s32 %v235, %v237
      %v239 = vrot.slane %v225, %v238
      %242 = vst [vmem:[#allocation2] sm:$0x33] %v232
      %vm243 = vcmask 254976
      %244 = vst.msk [vmem:[#allocation2 + $0x8] sm:$0x3] %vm243, %v239
      %v245 = vld [vmem:[%s192] sm:$0x3f]
      %v247 = vcombine.high %v245, %v245
      %v249 = vunpack.c.l.s4 1983009808
      %v250 = vunpack.c.0.s8 %v249
      %v251 = vlaneseq
      %v252 = vshrl.u32 %v251, 7
      %v253 = vsub.s32 %v250, %v252
      %v254 = vrot.slane %v245, %v253
      %v256 = vunpack.c.l.s4 1983009808
      %v257 = vunpack.c.0.s8 %v256
      %v258 = vlaneseq
      %v259 = vshrl.u32 %v258, 7
      %v260 = vsub.s32 %v257, %v259
      %v261 = vrot.slane %v247, %v260
      %262 = vrot.lane.b32.xlu0 %v254, 127
      %v263 = vpop.permute.xlu0 %262
      %264 = vrot.lane.b32.xlu0 %v261, 127
      %v265 = vpop.permute.xlu0 %264
      %v266 = vrot.slane %v263, 4
      %v267 = vrot.slane %v265, 4
      %vm268 = vcmask 1043456
      %v269 = vsel %vm268, %v266, %v267
      %vm270 = vcmask 1039360
      %v271 = vsel %vm270, %v263, %v269
      %274 = vst [vmem:[#allocation2 + $0xc] sm:$0x33] %v271
      %275 = vst.msk [vmem:[#allocation2 + $0x14] sm:$0x3] %vm243, %v265
      %v276 = vld [vmem:[%s192] sm:$0x3f]
      %v278 = vcombine.high %v276, %v276
      %v280 = vunpack.c.l.s4 1983009808
      %v281 = vunpack.c.0.s8 %v280
      %v282 = vlaneseq
      %v283 = vshrl.u32 %v282, 7
      %v284 = vsub.s32 %v281, %v283
      %v285 = vrot.slane %v276, %v284
      %v287 = vunpack.c.l.s4 1983009808
      %v288 = vunpack.c.0.s8 %v287
      %v289 = vlaneseq
      %v290 = vshrl.u32 %v289, 7
      %v291 = vsub.s32 %v288, %v290
      %v292 = vrot.slane %v278, %v291
      %293 = vrot.lane.b32.xlu0 %v285, 126
      %v294 = vpop.permute.xlu0 %293
      %295 = vrot.lane.b32.xlu0 %v292, 126
      %v296 = vpop.permute.xlu0 %295
      %v297 = vrot.slane %v294, 4
      %v298 = vrot.slane %v296, 4
      %v299 = vsel %vm268, %v297, %v298
      %vm300 = vcmask 1031168
      %v301 = vsel %vm300, %v294, %v299
      %304 = vst [vmem:[#allocation2 + $0x18] sm:$0x33] %v301
      %305 = vst.msk [vmem:[#allocation2 + $0x20] sm:$0x3] %vm243, %v296
      %v306 = vld [vmem:[%s192] sm:$0x3f]
      %v308 = vcombine.high %v306, %v306
      %v310 = vunpack.c.l.s4 1983009808
      %v311 = vunpack.c.0.s8 %v310
      %v312 = vlaneseq
      %v313 = vshrl.u32 %v312, 7
      %v314 = vsub.s32 %v311, %v313
      %v315 = vrot.slane %v306, %v314
      %v317 = vunpack.c.l.s4 1983009808
      %v318 = vunpack.c.0.s8 %v317
      %v319 = vlaneseq
      %v320 = vshrl.u32 %v319, 7
      %v321 = vsub.s32 %v318, %v320
      %v322 = vrot.slane %v308, %v321
      %323 = vrot.lane.b32.xlu0 %v315, 110
      %v324 = vpop.permute.xlu0 %323
      %325 = vrot.lane.b32.xlu0 %v322, 110
      %v326 = vpop.permute.xlu0 %325
      %v327 = vrot.slane %v324, 4
      %v328 = vrot.slane %v326, 4
      %v329 = vsel %vm268, %v327, %v328
      %vm330 = vcmask 900096
      %v331 = vsel %vm330, %v324, %v329
      %334 = vst [vmem:[#allocation2 + $0x24] sm:$0x33] %v331
      %335 = vst.msk [vmem:[#allocation2 + $0x2c] sm:$0x3] %vm243, %v326
      %v336 = vld [vmem:[%s192] sm:$0x3f]
      %v338 = vcombine.high %v336, %v336
      %v340 = vunpack.c.l.s4 1983009808
      %v341 = vunpack.c.0.s8 %v340
      %v342 = vlaneseq
      %v343 = vshrl.u32 %v342, 7
      %v344 = vsub.s32 %v341, %v343
      %v345 = vrot.slane %v336, %v344
      %v347 = vunpack.c.l.s4 1983009808
      %v348 = vunpack.c.0.s8 %v347
      %v349 = vlaneseq
      %v350 = vshrl.u32 %v349, 7
      %v351 = vsub.s32 %v348, %v350
      %v352 = vrot.slane %v338, %v351
      %353 = vrot.lane.b32.xlu0 %v345, 109
      %v354 = vpop.permute.xlu0 %353
      %355 = vrot.lane.b32.xlu0 %v352, 109
      %v356 = vpop.permute.xlu0 %355
      %v357 = vrot.slane %v354, 4
      %v358 = vrot.slane %v356, 4
      %v359 = vsel %vm268, %v357, %v358
      %vm360 = vcmask 891904
      %v361 = vsel %vm360, %v354, %v359
      %364 = vst [vmem:[#allocation2 + $0x30] sm:$0x33] %v361
      %365 = vst.msk [vmem:[#allocation2 + $0x38] sm:$0x3] %vm243, %v356
      %v366 = vld [vmem:[%s192] sm:$0x3f]
      %v368 = vcombine.high %v366, %v366
      %v370 = vunpack.c.l.s4 1983009808
      %v371 = vunpack.c.0.s8 %v370
      %v372 = vlaneseq
      %v373 = vshrl.u32 %v372, 7
      %v374 = vsub.s32 %v371, %v373
      %v375 = vrot.slane %v366, %v374
      %v377 = vunpack.c.l.s4 1983009808
      %v378 = vunpack.c.0.s8 %v377
      %v379 = vlaneseq
      %v380 = vshrl.u32 %v379, 7
      %v381 = vsub.s32 %v378, %v380
      %v382 = vrot.slane %v368, %v381
      %383 = vrot.lane.b32.xlu0 %v375, 108
      %v384 = vpop.permute.xlu0 %383
      %385 = vrot.lane.b32.xlu0 %v382, 108
      %v386 = vpop.permute.xlu0 %385
      %v387 = vrot.slane %v384, 4
      %v388 = vrot.slane %v386, 4
      %v389 = vsel %vm268, %v387, %v388
      %vm390 = vcmask 883712
      %v391 = vsel %vm390, %v384, %v389
      %394 = vst [vmem:[#allocation2 + $0x3c] sm:$0x33] %v391
      %395 = vst.msk [vmem:[#allocation2 + $0x44] sm:$0x3] %vm243, %v386
      %v396 = vld [vmem:[%s192] sm:$0x3f]
      %v398 = vcombine.high %v396, %v396
      %v400 = vunpack.c.l.s4 1983009808
      %v401 = vunpack.c.0.s8 %v400
      %v402 = vlaneseq
      %v403 = vshrl.u32 %v402, 7
      %v404 = vsub.s32 %v401, %v403
      %v405 = vrot.slane %v396, %v404
      %v407 = vunpack.c.l.s4 1983009808
      %v408 = vunpack.c.0.s8 %v407
      %v409 = vlaneseq
      %v410 = vshrl.u32 %v409, 7
      %v411 = vsub.s32 %v408, %v410
      %v412 = vrot.slane %v398, %v411
      %413 = vrot.lane.b32.xlu0 %v405, 92
      %v414 = vpop.permute.xlu0 %413
      %415 = vrot.lane.b32.xlu0 %v412, 92
      %v416 = vpop.permute.xlu0 %415
      %v417 = vrot.slane %v414, 4
      %v418 = vrot.slane %v416, 4
      %v419 = vsel %vm268, %v417, %v418
      %vm420 = vcmask 752640
      %v421 = vsel %vm420, %v414, %v419
      %424 = vst [vmem:[#allocation2 + $0x48] sm:$0x33] %v421
      %425 = vst.msk [vmem:[#allocation2 + $0x50] sm:$0x3] %vm243, %v416
      %v426 = vld [vmem:[%s192] sm:$0x3f]
      %v428 = vcombine.high %v426, %v426
      %v430 = vunpack.c.l.s4 1983009808
      %v431 = vunpack.c.0.s8 %v430
      %v432 = vlaneseq
      %v433 = vshrl.u32 %v432, 7
      %v434 = vsub.s32 %v431, %v433
      %v435 = vrot.slane %v426, %v434
      %v437 = vunpack.c.l.s4 1983009808
      %v438 = vunpack.c.0.s8 %v437
      %v439 = vlaneseq
      %v440 = vshrl.u32 %v439, 7
      %v441 = vsub.s32 %v438, %v440
      %v442 = vrot.slane %v428, %v441
      %443 = vrot.lane.b32.xlu0 %v435, 91
      %v444 = vpop.permute.xlu0 %443
      %445 = vrot.lane.b32.xlu0 %v442, 91
      %v446 = vpop.permute.xlu0 %445
      %v447 = vrot.slane %v444, 4
      %v448 = vrot.slane %v446, 4
      %v449 = vsel %vm268, %v447, %v448
      %vm450 = vcmask 744448
      %v451 = vsel %vm450, %v444, %v449
      %454 = vst [vmem:[#allocation2 + $0x54] sm:$0x33] %v451
      %455 = vst.msk [vmem:[#allocation2 + $0x5c] sm:$0x3] %vm243, %v446
      %v456 = vld [vmem:[%s192] sm:$0x3f]
      %v458 = vcombine.high %v456, %v456
      %v460 = vunpack.c.l.s4 1983009808
      %v461 = vunpack.c.0.s8 %v460
      %v462 = vlaneseq
      %v463 = vshrl.u32 %v462, 7
      %v464 = vsub.s32 %v461, %v463
      %v465 = vrot.slane %v456, %v464
      %v467 = vunpack.c.l.s4 1983009808
      %v468 = vunpack.c.0.s8 %v467
      %v469 = vlaneseq
      %v470 = vshrl.u32 %v469, 7
      %v471 = vsub.s32 %v468, %v470
      %v472 = vrot.slane %v458, %v471
      %473 = vrot.lane.b32.xlu0 %v465, 90
      %v474 = vpop.permute.xlu0 %473
      %475 = vrot.lane.b32.xlu0 %v472, 90
      %v476 = vpop.permute.xlu0 %475
      %v477 = vrot.slane %v474, 4
      %v478 = vrot.slane %v476, 4
      %v479 = vsel %vm268, %v477, %v478
      %vm480 = vcmask 736256
      %v481 = vsel %vm480, %v474, %v479
      %484 = vst [vmem:[#allocation2 + $0x60] sm:$0x33] %v481
      %485 = vst.msk [vmem:[#allocation2 + $0x68] sm:$0x3] %vm243, %v476
      %v486 = vld [vmem:[#allocation2] sm:$0xff]
      %v487 = vld [vmem:[#allocation2 + $0x8] sm:$0xf]
      %v488 = vld [vmem:[#allocation2 + $0xc] sm:$0xff]
      %v489 = vld [vmem:[#allocation2 + $0x14] sm:$0xf]
      %v490 = vld [vmem:[#allocation2 + $0x18] sm:$0xff]
      %v491 = vld [vmem:[#allocation2 + $0x20] sm:$0xf]
      %v492 = vld [vmem:[#allocation2 + $0x24] sm:$0xff]
      %v493 = vld [vmem:[#allocation2 + $0x2c] sm:$0xf]
      %v494 = vld [vmem:[#allocation2 + $0x30] sm:$0xff]
      %v495 = vld [vmem:[#allocation2 + $0x38] sm:$0xf]
      %v496 = vld [vmem:[#allocation2 + $0x3c] sm:$0xff]
      %v497 = vld [vmem:[#allocation2 + $0x44] sm:$0xf]
      %v498 = vld [vmem:[#allocation2 + $0x48] sm:$0xff]
      %v499 = vld [vmem:[#allocation2 + $0x50] sm:$0xf]
      %v500 = vld [vmem:[#allocation2 + $0x54] sm:$0xff]
      %v501 = vld [vmem:[#allocation2 + $0x5c] sm:$0xf]
      %v502 = vld [vmem:[#allocation2 + $0x60] sm:$0xff]
      %v503 = vld [vmem:[#allocation2 + $0x68] sm:$0xf]
      %v522 = vunpack.c.l.b16 %v486
      %v523 = vunpack.c.h.b16 %v486
      %v524 = vunpack.c.l.b16 %v487
      %v525 = vunpack.c.l.b16 %v488
      %v526 = vunpack.c.h.b16 %v488
      %v527 = vunpack.c.l.b16 %v489
      %v528 = vunpack.c.l.b16 %v490
      %v529 = vunpack.c.h.b16 %v490
      %v530 = vunpack.c.l.b16 %v491
      %v531 = vunpack.c.l.b16 %v492
      %v532 = vunpack.c.h.b16 %v492
      %v533 = vunpack.c.l.b16 %v493
      %v534 = vunpack.c.l.b16 %v494
      %v535 = vunpack.c.h.b16 %v494
      %v536 = vunpack.c.l.b16 %v495
      %v537 = vunpack.c.l.b16 %v496
      %v538 = vunpack.c.h.b16 %v496
      %v539 = vunpack.c.l.b16 %v497
      %v540 = vunpack.c.l.b16 %v498
      %v541 = vunpack.c.h.b16 %v498
      %v542 = vunpack.c.l.b16 %v499
      %v543 = vunpack.c.l.b16 %v500
      %v544 = vunpack.c.h.b16 %v500
      %v545 = vunpack.c.l.b16 %v501
      %v546 = vunpack.c.l.b16 %v502
      %v547 = vunpack.c.h.b16 %v502
      %v548 = vunpack.c.l.b16 %v503
      %v549 = vpack.c.b16 %v525, %v522
      %v550 = vpack.c.b16 %v526, %v523
      %v551 = vpack.c.b16 %v527, %v524
      %v552 = vpack.c.b16 %v531, %v528
      %v553 = vpack.c.b16 %v532, %v529
      %v554 = vpack.c.b16 %v533, %v530
      %v555 = vpack.c.b16 %v537, %v534
      %v556 = vpack.c.b16 %v538, %v535
      %v557 = vpack.c.b16 %v539, %v536
      %v558 = vpack.c.b16 %v543, %v540
      %v559 = vpack.c.b16 %v544, %v541
      %v560 = vpack.c.b16 %v545, %v542
      %v561 = vpack.c.b16 %v546, %v546
      %v562 = vpack.c.b16 %v547, %v547
      %v563 = vpack.c.b16 %v548, %v548
      %vm576 = vcmask 588800
      %v578 = vsel %vm576, %v222, 0
      %vm580 = vcmask 1043456
      %v582 = vsel %vm580, %v561, 0
      %v585 = vsel %vm580, %v562, 0
      %v588 = vsel %vm580, %v563, 0
      %590 = vmatprep.subr.bf16.mxu0 %v550
      %591 = vmatpush1.bf16.msra.mxu0 %v549
      %592 = vmatprep.subr.bf16.mxu0 %v553
      %593 = vmatpush1.bf16.msra.mxu0 %v552
      %594 = vmatprep.subr.bf16.mxu0 %v556
      %595 = vmatpush1.bf16.msra.mxu0 %v555
      %596 = vmatprep.subr.bf16.mxu0 %v559
      %597 = vmatpush1.bf16.msra.mxu0 %v558
      %598 = vmatprep.subr.bf16.mxu0 %v585
      %599 = vmatpush1.bf16.msra.mxu0 %v582
      %600 = vmatprep.subr.bf16.mxu0 0
      %601 = vmatpush1.bf16.msra.mxu0 0
      %602 = vmatprep.subr.bf16.mxu0 0
      %603 = vmatpush1.bf16.msra.mxu0 0
      %604 = vmatprep.subr.bf16.mxu0 0
      %605 = vmatpush1.bf16.msra.mxu0 0
      %606 = vmatprep.subr.bf16.mxu0 0
      %607 = vmatpush1.bf16.msra.mxu0 0
      %608 = vmatprep.subr.bf16.mxu0 0
      %609 = vmatpush1.bf16.msra.mxu0 0
      %610 = vmatprep.subr.bf16.mxu0 0
      %611 = vmatpush1.bf16.msra.mxu0 0
      %612 = vmatprep.subr.bf16.mxu0 0
      %613 = vmatpush1.bf16.msra.mxu0 0
      %614 = vmatprep.subr.bf16.mxu0 0
      %615 = vmatpush1.bf16.msra.mxu0 0
      %616 = vmatprep.subr.bf16.mxu0 0
      %617 = vmatpush1.bf16.msra.mxu0 0
      %618 = vmatprep.subr.bf16.mxu0 0
      %619 = vmatpush1.bf16.msra.mxu0 0
      %620 = vmatprep.subr.bf16.mxu0 0
      %621 = vmatpush1.bf16.msra.mxu0 0
      %622 = vmatprep.mubr.bf16.mxu0 0
      %623 = vmatmul.mubr.bf16.gmra.mrb[0].mxu0 %v578
      %v624 = vpop.f32.mrb[0].mxu0
      %v625 = vadd.f32 0.0, %v624
      %v626 = vpop.f32.mrb[0].mxu0
      %v627 = vadd.f32 0.0, %v626
      %v628 = vpop.f32.mrb[0].mxu0
      %v629 = vpop.f32.mrb[0].mxu0
      %630 = vdwg.mxu0
      %631 = vmatprep.subr.bf16.mxu0 0
      %632 = vmatpush1.bf16.msra.mxu0 %v551
      %633 = vmatprep.subr.bf16.mxu0 0
      %634 = vmatpush1.bf16.msra.mxu0 %v554
      %635 = vmatprep.subr.bf16.mxu0 0
      %636 = vmatpush1.bf16.msra.mxu0 %v557
      %637 = vmatprep.subr.bf16.mxu0 0
      %638 = vmatpush1.bf16.msra.mxu0 %v560
      %639 = vmatprep.subr.bf16.mxu0 0
      %640 = vmatpush1.bf16.msra.mxu0 %v588
      %641 = vmatprep.subr.bf16.mxu0 0
      %642 = vmatpush1.bf16.msra.mxu0 0
      %643 = vmatprep.subr.bf16.mxu0 0
      %644 = vmatpush1.bf16.msra.mxu0 0
      %645 = vmatprep.subr.bf16.mxu0 0
      %646 = vmatpush1.bf16.msra.mxu0 0
      %647 = vmatprep.subr.bf16.mxu0 0
      %648 = vmatpush1.bf16.msra.mxu0 0
      %649 = vmatprep.subr.bf16.mxu0 0
      %650 = vmatpush1.bf16.msra.mxu0 0
      %651 = vmatprep.subr.bf16.mxu0 0
      %652 = vmatpush1.bf16.msra.mxu0 0
      %653 = vmatprep.subr.bf16.mxu0 0
      %654 = vmatpush1.bf16.msra.mxu0 0
      %655 = vmatprep.subr.bf16.mxu0 0
      %656 = vmatpush1.bf16.msra.mxu0 0
      %657 = vmatprep.subr.bf16.mxu0 0
      %658 = vmatpush1.bf16.msra.mxu0 0
      %659 = vmatprep.subr.bf16.mxu0 0
      %660 = vmatpush1.bf16.msra.mxu0 0
      %661 = vmatprep.subr.bf16.mxu0 0
      %662 = vmatpush1.bf16.msra.mxu0 0
      %663 = vmatprep.mubr.bf16.mxu0 0
      %664 = vmatmul.mubr.bf16.gmra.mrb[0].mxu0 %v578
      %v665 = vpop.f32.mrb[0].mxu0
      %v666 = vadd.f32 0.0, %v665
      %v667 = vpop.f32.mrb[0].mxu0
      %v668 = vpop.f32.mrb[0].mxu0
      %v669 = vpop.f32.mrb[0].mxu0
      %670 = vdwg.mxu0
      %v671 = vld [vmem:[%s2] sm:$0xff]
      %673 = vset.pattern.permute.xlu0 0
      %674 = vperm.xlu0 %673, %v671
      %v675 = vpop.permute.xlu0 %674
      %v677 = vmul.f32 %v625, %v675
      %v678 = vmul.f32 %v627, %v675
      %v679 = vmul.f32 %v666, %v675
      %v680 = vld [vmem:[%s3] sm:$0xff]
      %682 = vset.pattern.permute.xlu0 0
      %683 = vperm.xlu0 %682, %v680
      %v684 = vpop.permute.xlu0 %683
      %v686 = vadd.f32 %v677, %v684
      %v687 = vadd.f32 %v678, %v684
      %v688 = vadd.f32 %v679, %v684
      %v689 = vpack.c.bf16 %v686, %v686
      %v690 = vpack.c.bf16 %v687, %v687
      %v691 = vpack.c.bf16 %v688, %v688
      %v695 = vunpack.c.l.b16 %v689
      %v696 = vunpack.c.l.b16 %v690
      %v697 = vunpack.c.l.b16 %v691
      %v698 = vpack.c.b16 %v696, %v695
      %v699 = vpack.c.b16 %v697, %v697
      %702 = vst [vmem:[%s197] sm:$0xff] %v698
      %vm703 = vcmask 257024
      %704 = vst.msk [vmem:[%s197 + $0x8] sm:$0xf] %vm703, %v699
      %p705 = scmp.lt.s32.totalorder %s15, 1
      %s706 = scalar_select %p705, %s15, 1
      %s707 = smul.addr %s706, 3
      %s708 = smul.addr %s707, 4
      %s709 = scalar_lea.vmem %s4, %s708
      // Predicated region
      $region41: #{basic_conv2d.1} parent=35 // pred_check
        %p710 = pneg %p122
      $region42: #{basic_conv2d.1} parent=35 // pred_check_branch
        %712 = sbr.rel (%p710) target = $region44
      $region43: #{basic_conv2d.1} parent=35 // pred_region
        _
      $region44: #{basic_conv2d.1} parent=35 // pred_fallthru
        _
    $region36: #{basic_conv2d.1} parent=5 // pred_fallthru
      _
    %p713 = scmp.le.s32.totalorder 2, %s10
    // Predicated region
    $region45: #{basic_conv2d.1} parent=5 // pred_check
      %p714 = pneg %p713
    $region46: #{basic_conv2d.1} parent=5 // pred_check_branch
      %716 = sbr.rel (%p714) target = $region48
    $region47: #{basic_conv2d.1} parent=5 // pred_region
      %s717 = ssub.s32 %s10, 2
      // Predicated region
      $region49: #{basic_conv2d.1} parent=47 // pred_check
        %p718 = pneg %p128
      $region50: #{basic_conv2d.1} parent=47 // pred_check_branch
        %720 = sbr.rel (%p718) target = $region52
      $region51: #{basic_conv2d.1} parent=47 // pred_region
        %p721 = scmp.lt.s32.totalorder %s16, 1
        %s722 = scalar_select %p721, %s16, 1
        %s723 = smul.addr %s722, 3
        %s724 = smul.addr %s723, 4
        %s725 = scalar_lea.vmem %s4, %s724
      $region52: #{basic_conv2d.1} parent=47 // pred_fallthru
        _
    $region48: #{basic_conv2d.1} parent=5 // pred_fallthru
      _
  $region6: #{basic_conv2d.1} parent=0 // loop_footer
    %s14 = sadd.s32 1, %s10
  $region7: #{basic_conv2d.1} parent=0 // loop_footer_branch
    %9 = sbr.rel target = $region3
  $region8: #{basic_conv2d.1} parent=0 // loop_exit
    _

</llo_original>
